<compile_context>
chip_gen: v7x
topology: tpu7x:2x2x1
jax: 0.10.0
libtpu: 0.0.40
codegen_flags: <defaults>
</compile_context>

<pallas_src>
import functools

import numpy as np

import jax
import jax.numpy as jnp
from jax.experimental import pallas as pl
from jax.experimental.pallas import tpu as pltpu


# ---------------------------------------------------------------------------
# Pallas kernel: fused ConvTranspose2d (k == stride, pad 0) + BN(eval) + ReLU.
#   x_ref : (Cin, T)             f32 activations, spatial on lanes
#   w_ref : (k*k*Cout, Cin)      bf16 weights (un-scaled), row = (ky*k+kx)*Cout+co
#   s_ref : (k*k*Cout, 1)        f32 BN scale per output row (gamma / sqrt(var+eps))
#   b_ref : (k*k*Cout, 1)        f32 folded bias (conv_bias*scale + shift)
#   o_ref : (k*k*Cout, T)        bf16 per-tap output planes (lane-dense)
# ---------------------------------------------------------------------------
def _deconv_bn_relu_kernel(x_ref, w_ref, s_ref, b_ref, o_ref):
    # In-register cast of the f32 activations to bf16 (VPU, hidden under DMA),
    # then a single MXU push with f32 accumulation.
    x_bf16 = x_ref[...].astype(jnp.bfloat16)
    acc = jnp.dot(w_ref[...], x_bf16, preferred_element_type=jnp.float32)
    # f32 epilogue: per-row BN scale, folded bias, ReLU; cast only at the store.
    acc = jnp.maximum(acc * s_ref[...] + b_ref[...], 0.0)
    o_ref[...] = acc.astype(o_ref.dtype)


def _vmem_budget_bytes():
    """Conservative per-call VMEM budget that fits the default scoped limit
    on every generation (v5e 16 MiB scoped, v6e 32 MiB, v7x 32 MiB / 64 MiB)."""
    try:
        info = pltpu.get_tpu_info()
        return int(min(int(info.vmem_capacity_bytes) // 8, 12 * 1024 * 1024))
    except Exception:
        return 12 * 1024 * 1024


def _choose_lane_tiling(hw, rows_out, cin, n_batch):
    """Pick (hw_pad, lane_tile).

    hw_pad is hw rounded up to a multiple of 128 (so every store is a dense,
    unmasked vst); lane_tile divides hw_pad, is a multiple of 128, fits the
    VMEM budget (double-buffered f32 input block + bf16 output block) and is
    split so the total grid has >= 2 steps whenever hw allows it (v7x has two
    TensorCores to feed when N == 1)."""
    hw_pad = ((hw + 127) // 128) * 128
    # double-buffered bytes per lane: f32 x block + bf16 output block
    per_lane = 2 * (cin * 4) + 2 * (rows_out * 2)
    cap = _vmem_budget_bytes() // max(per_lane, 1)
    cap = max(128, min(cap, 8192))
    cap = (cap // 128) * 128

    min_tiles = 1 if n_batch >= 2 else 2
    best = 128
    t = 128
    limit = min(cap, hw_pad)
    while t <= limit:
        if hw_pad % t == 0 and (hw_pad // t) >= min_tiles:
            best = t
        t += 128
    return hw_pad, best


@functools.partial(jax.jit, static_argnames=("k_size", "stride", "padding"))
def deconv2d_bn_relu_fused(x_nchw, w, b_conv, gamma, beta, r_mean, r_var, *,
                           k_size, stride, padding, eps=1e-5):
    """Fused ConvTranspose2d + BatchNorm2d(eval) + ReLU.  x_nchw: (N,Cin,H,W).

    Returns bf16 activations (f32 accumulate inside the kernel)."""
    assert k_size == stride and padding == 0, (
        "Pallas path implements the non-overlapping deconv (k_size == stride, "
        "padding == 0)")
    # TODO(synk): general overlapping ConvTranspose2d configs (stride != k_size
    # or padding != 0) are not implemented in the Pallas path.
    N, cin, H, W = x_nchw.shape
    cout = w.shape[1]
    s = int(stride)
    hw = H * W
    rows = s * s * cout

    # ---- eval-mode BatchNorm folding (trace time) ---------------------------
    # TODO(synk): training-mode BatchNorm (per-batch statistics + running-stat
    # update) is not implemented; BN is applied in eval mode.
    scale = gamma / jnp.sqrt(r_var + eps)                       # (Cout,)
    shift = beta - r_mean * scale                               # (Cout,)
    bias_total = b_conv * scale + shift                         # (Cout,)

    # Pack taps onto matmul rows: row = (ky*k + kx)*Cout + co.  The BN scale is
    # NOT folded into the bf16 weights (applied per-row in the f32 epilogue).
    w_rows = jnp.transpose(w, (2, 3, 1, 0)).reshape(rows, cin)
    w_rows = w_rows.astype(jnp.bfloat16)                        # MXU operand
    s_rows = jnp.tile(scale, s * s).reshape(rows, 1).astype(jnp.float32)
    b_rows = jnp.tile(bias_total, s * s).reshape(rows, 1).astype(jnp.float32)

    # NCHW -> (N, Cin, H*W) is a free reshape; keep the input dtype (f32) and
    # cast to bf16 in-register inside the kernel (no extra XLA cast pass).
    x2 = x_nchw.reshape(N, cin, hw)

    hw_pad, t = _choose_lane_tiling(hw, rows, cin, N)
    if hw_pad != hw:
        # Pad the flattened spatial axis so every lane tile is a dense multiple
        # of 128 (no lane-sparse vst.msk, no oversized fallback tile).
        x2 = jnp.pad(x2, ((0, 0), (0, 0), (0, hw_pad - hw)))
    grid = (N, hw_pad // t)

    out3 = pl.pallas_call(
        _deconv_bn_relu_kernel,
        out_shape=jax.ShapeDtypeStruct((N, rows, hw_pad), jnp.bfloat16),
        grid_spec=pltpu.PrefetchScalarGridSpec(
            num_scalar_prefetch=0,
            grid=grid,
            in_specs=[
                pl.BlockSpec((pl.Squeezed(), cin, t), lambda n, j: (n, 0, j)),
                pl.BlockSpec((rows, cin), lambda n, j: (0, 0)),
                pl.BlockSpec((rows, 1), lambda n, j: (0, 0)),
                pl.BlockSpec((rows, 1), lambda n, j: (0, 0)),
            ],
            out_specs=pl.BlockSpec((pl.Squeezed(), rows, t),
                                   lambda n, j: (n, 0, j)),
        ),
        compiler_params=pltpu.CompilerParams(
            dimension_semantics=("parallel", "parallel"),
        ),
    )(x2, w_rows, s_rows, b_rows)

    if hw_pad != hw:
        out3 = out3[:, :, :hw]

    # Un-interleave the k*k tap planes back into NCHW spatial order (bf16 now,
    # so this XLA pass moves half the bytes it used to).
    # TODO(synk): fold this un-interleave into the kernel (XLU lane interleave)
    # or into the downstream consumer to remove the extra HBM pass entirely.
    out = out3.reshape(N, s, s, cout, H, W)
    out = jnp.transpose(out, (0, 3, 4, 1, 5, 2))                # (N,Cout,H,s,W,s)
    return out.reshape(N, cout, H * s, W * s)


# ---------------------------------------------------------------------------
# Module wrapper mirroring the PyTorch deconv2DBatchNormRelu.
# ---------------------------------------------------------------------------
class Deconv2DBatchNormRelu:
    def __init__(self, key, in_channels, n_filters, k_size, stride, padding,
                 bias=True, eps=1e-5):
        ks = jax.random.split(key, 6)
        fan_in = in_channels * k_size * k_size
        bound = 1.0 / (fan_in ** 0.5)
        # ConvTranspose2d parameters (PyTorch layout: (Cin, Cout, kH, kW)).
        self.w = jax.random.uniform(ks[0], (in_channels, n_filters, k_size, k_size),
                                    jnp.float32, -bound, bound)
        self.b = (jax.random.uniform(ks[1], (n_filters,), jnp.float32, -bound, bound)
                  if bias else jnp.zeros((n_filters,), jnp.float32))
        # BatchNorm2d parameters / running statistics (eval mode).
        self.gamma = 1.0 + 0.1 * jax.random.normal(ks[2], (n_filters,), jnp.float32)
        self.beta = 0.1 * jax.random.normal(ks[3], (n_filters,), jnp.float32)
        self.running_mean = 0.1 * jax.random.normal(ks[4], (n_filters,), jnp.float32)
        self.running_var = 1.0 + 0.2 * jax.random.uniform(ks[5], (n_filters,),
                                                          jnp.float32)
        self.eps = float(eps)
        self.k_size, self.stride, self.padding = int(k_size), int(stride), int(padding)

    def __call__(self, x_nchw):
        return deconv2d_bn_relu_fused(
            x_nchw, self.w, self.b, self.gamma, self.beta,
            self.running_mean, self.running_var,
            k_size=self.k_size, stride=self.stride, padding=self.padding,
            eps=self.eps)


# ---------------------------------------------------------------------------
# Pure-JAX f32 reference (ConvTranspose2d, k == stride, pad 0 -> BN -> ReLU).
# ---------------------------------------------------------------------------
def deconv_bn_relu_reference(x, w, b_conv, gamma, beta, r_mean, r_var, *,
                             stride, eps=1e-5):
    N, cin, H, W = x.shape
    cout, k = w.shape[1], w.shape[2]
    assert k == stride
    y = jnp.einsum("nihw,iokl->nohkwl", x, w)                   # (N,Cout,H,k,W,k)
    y = y.reshape(N, cout, H * k, W * k) + b_conv[None, :, None, None]
    y = (y - r_mean[None, :, None, None]) / jnp.sqrt(
        r_var[None, :, None, None] + eps)
    y = y * gamma[None, :, None, None] + beta[None, :, None, None]
    return jnp.maximum(y, 0.0)


if __name__ == "__main__":
    key = jax.random.PRNGKey(0)
    k_x, k_p = jax.random.split(key)

    # PyTorch-style NCHW input: batch=2, in_channels=4, spatial 16x16.
    x = jax.random.normal(k_x, (2, 4, 16, 16), jnp.float32)

    # deconv2DBatchNormRelu(in_channels=4, n_filters=8, k_size=2, stride=2, padding=0)
    mod = Deconv2DBatchNormRelu(k_p, in_channels=4, n_filters=8,
                                k_size=2, stride=2, padding=0, bias=True)

    out = mod(x)
    out = jax.block_until_ready(out)
    assert out.shape == (2, 8, 32, 32)

    ref = deconv_bn_relu_reference(x, mod.w, mod.b, mod.gamma, mod.beta,
                                   mod.running_mean, mod.running_var,
                                   stride=2, eps=mod.eps)
    ref = jax.block_until_ready(ref)
    # bf16 MXU operands + bf16 output -> loose tolerance vs f32 reference.
    np.testing.assert_allclose(np.asarray(out.astype(jnp.float32)),
                               np.asarray(ref), rtol=5e-2, atol=5e-2)

    print("KERNEL_OK")
</pallas_src>

<mosaic_0001>
module attributes {stable_mosaic.version = 11 : i64} {
  func.func @_deconv_bn_relu_kernel(%arg0: i32, %arg1: i32, %arg2: memref<1x4x256xf32, #tpu.memory_space<vmem>>, %arg3: memref<32x4xbf16, #tpu.memory_space<vmem>>, %arg4: memref<32x1xf32, #tpu.memory_space<vmem>>, %arg5: memref<32x1xf32, #tpu.memory_space<vmem>>, %arg6: memref<1x32x256xbf16, #tpu.memory_space<vmem>>) attributes {dimension_semantics = [#tpu.dimension_semantics<parallel>, #tpu.dimension_semantics<parallel>], iteration_bounds = array<i64: 2, 1>, scalar_prefetch = 0 : i64, scratch_operands = 0 : i64, tpu.core_type = #tpu.core_type<tc>, window_params = [{transform_indices = @transform_0, window_bounds = array<i64: 1, 4, 256>}, {pipeline_mode = #tpu.pipeline_mode<synchronous>, transform_indices = @transform_1, window_bounds = array<i64: 32, 4>}, {pipeline_mode = #tpu.pipeline_mode<synchronous>, transform_indices = @transform_2, window_bounds = array<i64: 32, 1>}, {pipeline_mode = #tpu.pipeline_mode<synchronous>, transform_indices = @transform_3, window_bounds = array<i64: 32, 1>}, {transform_indices = @transform_4, window_bounds = array<i64: 1, 32, 256>}]} {
    %c0 = arith.constant 0 : index
    %c0_0 = arith.constant 0 : index
    %c0_1 = arith.constant 0 : index
    %0 = vector.load %arg2[%c0, %c0_0, %c0_1] : memref<1x4x256xf32, #tpu.memory_space<vmem>>, vector<1x4x256xf32>
    %1 = vector.shape_cast %0 : vector<1x4x256xf32> to vector<4x256xf32>
    %2 = arith.truncf %1 : vector<4x256xf32> to vector<4x256xbf16>
    %c0_2 = arith.constant 0 : index
    %c0_3 = arith.constant 0 : index
    %3 = vector.load %arg3[%c0_2, %c0_3] : memref<32x4xbf16, #tpu.memory_space<vmem>>, vector<32x4xbf16>
    %cst = arith.constant dense<0.000000e+00> : vector<32x256xf32>
    %4 = tpu.matmul %3, %2, %cst {dimension_numbers = #tpu.dot_dimension_numbers<[1], [0], [0], [1], [0, 0, 1, 1], [], []>} : vector<32x4xbf16>, vector<4x256xbf16>, vector<32x256xf32> -> vector<32x256xf32>
    %c0_4 = arith.constant 0 : index
    %c0_5 = arith.constant 0 : index
    %5 = vector.load %arg4[%c0_4, %c0_5] : memref<32x1xf32, #tpu.memory_space<vmem>>, vector<32x1xf32>
    %6 = vector.broadcast %5 : vector<32x1xf32> to vector<32x256xf32>
    %7 = arith.mulf %4, %6 : vector<32x256xf32>
    %c0_6 = arith.constant 0 : index
    %c0_7 = arith.constant 0 : index
    %8 = vector.load %arg5[%c0_6, %c0_7] : memref<32x1xf32, #tpu.memory_space<vmem>>, vector<32x1xf32>
    %9 = vector.broadcast %8 : vector<32x1xf32> to vector<32x256xf32>
    %10 = arith.addf %7, %9 : vector<32x256xf32>
    %cst_8 = arith.constant 0.000000e+00 : f32
    %11 = vector.broadcast %cst_8 : f32 to vector<32x256xf32>
    %12 = arith.maximumf %10, %11 : vector<32x256xf32>
    %13 = arith.truncf %12 : vector<32x256xf32> to vector<32x256xbf16>
    %c0_9 = arith.constant 0 : index
    %c0_10 = arith.constant 0 : index
    %c0_11 = arith.constant 0 : index
    %14 = vector.load %arg6[%c0_9, %c0_10, %c0_11] : memref<1x32x256xbf16, #tpu.memory_space<vmem>>, vector<1x32x256xbf16>
    %15 = vector.shape_cast %14 : vector<1x32x256xbf16> to vector<32x256xbf16>
    %16 = vector.shape_cast %13 : vector<32x256xbf16> to vector<1x32x256xbf16>
    tpu.vector_store %arg6[%c0_9, %c0_10, %c0_11], %16 {strides = array<i32>} : memref<1x32x256xbf16, #tpu.memory_space<vmem>>, vector<1x32x256xbf16>,
    return
  }
  func.func @transform_0(%arg0: i32, %arg1: i32) -> (i32, i32, i32) {
    %c0_i32 = arith.constant 0 : i32
    %c0_i32_0 = arith.constant 0 : i32
    return %arg0, %c0_i32, %arg1 : i32, i32, i32
  }
  func.func @transform_1(%arg0: i32, %arg1: i32) -> (i32, i32) {
    %c0_i32 = arith.constant 0 : i32
    %c0_i32_0 = arith.constant 0 : i32
    %c0_i32_1 = arith.constant 0 : i32
    return %c0_i32, %c0_i32_0 : i32, i32
  }
  func.func @transform_2(%arg0: i32, %arg1: i32) -> (i32, i32) {
    %c0_i32 = arith.constant 0 : i32
    %c0_i32_0 = arith.constant 0 : i32
    %c0_i32_1 = arith.constant 0 : i32
    return %c0_i32, %c0_i32_0 : i32, i32
  }
  func.func @transform_3(%arg0: i32, %arg1: i32) -> (i32, i32) {
    %c0_i32 = arith.constant 0 : i32
    %c0_i32_0 = arith.constant 0 : i32
    %c0_i32_1 = arith.constant 0 : i32
    return %c0_i32, %c0_i32_0 : i32, i32
  }
  func.func @transform_4(%arg0: i32, %arg1: i32) -> (i32, i32, i32) {
    %c0_i32 = arith.constant 0 : i32
    %c0_i32_0 = arith.constant 0 : i32
    return %arg0, %c0_i32, %arg1 : i32, i32, i32
  }
}

</mosaic_0001>

<llo_original>
// kernel: tile.18
$region0: #{tile.18}
  #allocation0 [shape = 's32[1]{0}', space=sflag, size = 0x4, scoped, tag = 'scoped memory for tile.18']
  %s0 = inlined_call_operand.vmem [shape: f32[8], index: 0, kind: input, shape index: {}]
  %s1 = inlined_call_operand.vmem [shape: f32[4,8], index: 1, kind: output, shape index: {}]
  // Predicated region
  $region2: #{tile.18} parent=0 // pred_check
    _
  $region3: #{tile.18} parent=0 // pred_check_branch
    %3 = sbr.rel (0) target = $region5
  $region4: #{tile.18} parent=0 // pred_region
    _
  $region5: #{tile.18} parent=0 // pred_fallthru
    _
  %v4 = vld [vmem:[%s0] ss:$0 sm:$0xff]
  %5 = vst [vmem:[%s1] sm:$0xf] %v4

// kernel: tile.0
$region0: #{tile.0}
  %s0 = inlined_call_operand.vmem [shape: f32[4,8], index: 0, kind: input, shape index: {}]
  %s1 = inlined_call_operand.vmem [shape: f32[32,1], index: 1, kind: output, shape index: {}]
  $region1: #{tile.0} parent=0
    #allocation0 [shape = 'u8[4096]{0}', space=vmem, size = 0x1000, scoped, tag = 'scoped mem for input reshape']
    %s3 = sshllo.u32 0, 4
    %v4 = vld [vmem:[%s0] sm:%s3]
    %5 = vst [vmem:[#allocation0] sm:%s3] %v4
    %v6 = vld [vmem:[#allocation0] sm:$0xf]
    %vm7 = vcmask 7168
    %8 = vst.msk [vmem:[%s1] ss:$8 sm:$0xf] %vm7, %v6
    %v9 = vld [vmem:[#allocation0] sm:$0xf]
    %10 = vrot.lane.b32.xlu0 %v9, 127
    %v11 = vpop.permute.xlu0 %10
    %vm12 = vcmask 7168
    %s13 = scalar_lea.vmem %s1, 1
    %14 = vst.msk [vmem:[%s13] ss:$8 sm:$0xf] %vm12, %v11
    %v15 = vld [vmem:[#allocation0] sm:$0xf]
    %16 = vrot.lane.b32.xlu0 %v15, 126
    %v17 = vpop.permute.xlu0 %16
    %vm18 = vcmask 7168
    %s19 = scalar_lea.vmem %s1, 2
    %20 = vst.msk [vmem:[%s19] ss:$8 sm:$0xf] %vm18, %v17
    %v21 = vld [vmem:[#allocation0] sm:$0xf]
    %22 = vrot.lane.b32.xlu0 %v21, 125
    %v23 = vpop.permute.xlu0 %22
    %vm24 = vcmask 7168
    %s25 = scalar_lea.vmem %s1, 3
    %26 = vst.msk [vmem:[%s25] ss:$8 sm:$0xf] %vm24, %v23
    %v27 = vld [vmem:[#allocation0] sm:$0xf]
    %28 = vrot.lane.b32.xlu0 %v27, 124
    %v29 = vpop.permute.xlu0 %28
    %vm30 = vcmask 7168
    %s31 = scalar_lea.vmem %s1, 4
    %32 = vst.msk [vmem:[%s31] ss:$8 sm:$0xf] %vm30, %v29
    %v33 = vld [vmem:[#allocation0] sm:$0xf]
    %34 = vrot.lane.b32.xlu0 %v33, 123
    %v35 = vpop.permute.xlu0 %34
    %vm36 = vcmask 7168
    %s37 = scalar_lea.vmem %s1, 5
    %38 = vst.msk [vmem:[%s37] ss:$8 sm:$0xf] %vm36, %v35
    %v39 = vld [vmem:[#allocation0] sm:$0xf]
    %40 = vrot.lane.b32.xlu0 %v39, 122
    %v41 = vpop.permute.xlu0 %40
    %vm42 = vcmask 7168
    %s43 = scalar_lea.vmem %s1, 6
    %44 = vst.msk [vmem:[%s43] ss:$8 sm:$0xf] %vm42, %v41
    %v45 = vld [vmem:[#allocation0] sm:$0xf]
    %46 = vrot.lane.b32.xlu0 %v45, 121
    %v47 = vpop.permute.xlu0 %46
    %vm48 = vcmask 7168
    %s49 = scalar_lea.vmem %s1, 7
    %50 = vst.msk [vmem:[%s49] ss:$8 sm:$0xf] %vm48, %v47

// kernel: deconv2d_bn_relu_fused.1
$region0: #{deconv2d_bn_relu_fused.1}
  #allocation0 [shape = 'u32[]', space=smem, size = 0x4, offset = 0x4, fixed_abs, tag = 'smem constant byte address 0x4 - core index']
  #allocation1 [shape = 'u32[144,128]{1,0:T(1,128)}', space=vmem, size = 0x12000, scoped, tag = 'internal scratch']
  %s0 = inlined_call_operand.vmem [shape: f32[2,4,256], index: 0, kind: input, shape index: {}]
  %s1 = inlined_call_operand.vmem [shape: bf16[32,4], index: 1, kind: input, shape index: {}]
  %s2 = inlined_call_operand.vmem [shape: f32[32,1], index: 2, kind: input, shape index: {}]
  %s3 = inlined_call_operand.vmem [shape: f32[32,1], index: 3, kind: input, shape index: {}]
  %s4 = inlined_call_operand.vmem [shape: bf16[2,32,256], index: 4, kind: output, shape index: {}]
  %s5 = sld [smem:[#allocation0]]
  $region49: #{deconv2d_bn_relu_fused.1} parent=0
    _
  %s7 = ssub.s32 1, %s5
  %s8 = scalar_select 0, %s7, %s5
  loop: start=0, step=1, limit=4
  $region2: #{deconv2d_bn_relu_fused.1} parent=0 // loop_pre_header
    _
  $region3: #{deconv2d_bn_relu_fused.1} parent=0 // loop_header
    %s10 = sphi 0, %s14
    %p11 = scmp.ge.s32.totalorder %s10, 4
    %s17 = sphi 0, %s29
    %s18 = sphi 0, %s25
    %s19 = sphi 0, %s17
    %s20 = sphi 0, %s18
    %s21 = sphi 0, %s19
    %s22 = sphi 0, %s20
    %s34 = sphi 0, %s36
    %s37 = sphi 0, %s34
    %s38 = sphi 0, %s37
    %s54 = sphi 0, %s38
    %s58 = sphi 0, %s58
    %s60 = sphi 0, %s58
    %s61 = sphi 0, %s60
    %s75 = sphi 0, %s61
    %s79 = sphi 0, %s79
    %s81 = sphi 0, %s79
    %s82 = sphi 0, %s81
    %s96 = sphi 0, %s82
    %s100 = sphi 0, %s100
    %s102 = sphi 0, %s100
    %s103 = sphi 0, %s102
    %s117 = sphi 0, %s103
    %s125 = sphi 0, %s127
    %s128 = sphi 0, %s125
    %s129 = sphi 0, %s128
    %s145 = sphi 0, %s129
  $region4: #{deconv2d_bn_relu_fused.1} parent=0 // loop_header_branch
    %13 = sbr.rel (%p11) target = $region8
  $region5: #{deconv2d_bn_relu_fused.1} parent=0 // loop_body
    %s15 = ssub.s32 %s10, 1
    %s16 = ssub.s32 %s10, 2
    %s23 = sadd.s32 1, %s18
    %p24 = scmp.ge.s32.totalorder %s23, 1
    %s25 = scalar_select %p24, 0, %s23
    %s26 = sadd.s32 1, %s17
    %s27 = scalar_select %p24, %s26, %s17
    %p28 = scmp.ge.s32.totalorder %s27, 2
    %s29 = scalar_select %p28, 0, %s27
    %s30 = ssub.s32 %s17, %s29
    %s31 = ssub.s32 %s18, %s25
    %s32 = sor.u32 %s30, %s31
    %p33 = scmp.eq.s32.totalorder %s32, 0
    %s35 = sadd.s32 %s34, 1
    %s36 = scalar_select %p33, %s34, %s35
    %p39 = pneg %p33
    %p40 = scmp.eq.s32.totalorder %s10, 1
    %p41 = por %p39, %p40
    %p42 = scmp.ne.s32.totalorder %s34, %s37
    %p43 = scmp.eq.s32.totalorder %s10, 0
    %p44 = por %p42, %p43
    %p45 = scmp.ne.s32.totalorder %s34, %s37
    %p46 = scmp.eq.s32.totalorder %s15, 1
    %p47 = por %p45, %p46
    %p48 = scmp.ne.s32.totalorder %s37, %s38
    %p49 = scmp.eq.s32.totalorder %s15, 0
    %p50 = por %p48, %p49
    %p51 = scmp.ne.s32.totalorder %s37, %s38
    %p52 = scmp.eq.s32.totalorder %s16, 1
    %p53 = por %p51, %p52
    %p55 = scmp.ne.s32.totalorder %s38, %s54
    %p56 = scmp.eq.s32.totalorder %s16, 0
    %p57 = por %p55, %p56
    %s59 = sadd.s32 %s58, 1
    %p62 = scmp.eq.s32.totalorder %s10, 1
    %p63 = scmp.ne.s32.totalorder %s58, %s60
    %p64 = scmp.eq.s32.totalorder %s10, 0
    %p65 = por %p63, %p64
    %p66 = scmp.ne.s32.totalorder %s58, %s60
    %p67 = scmp.eq.s32.totalorder %s15, 1
    %p68 = por %p66, %p67
    %p69 = scmp.ne.s32.totalorder %s60, %s61
    %p70 = scmp.eq.s32.totalorder %s15, 0
    %p71 = por %p69, %p70
    %p72 = scmp.ne.s32.totalorder %s60, %s61
    %p73 = scmp.eq.s32.totalorder %s16, 1
    %p74 = por %p72, %p73
    %p76 = scmp.ne.s32.totalorder %s61, %s75
    %p77 = scmp.eq.s32.totalorder %s16, 0
    %p78 = por %p76, %p77
    %s80 = sadd.s32 %s79, 1
    %p83 = scmp.eq.s32.totalorder %s10, 1
    %p84 = scmp.ne.s32.totalorder %s79, %s81
    %p85 = scmp.eq.s32.totalorder %s10, 0
    %p86 = por %p84, %p85
    %p87 = scmp.ne.s32.totalorder %s79, %s81
    %p88 = scmp.eq.s32.totalorder %s15, 1
    %p89 = por %p87, %p88
    %p90 = scmp.ne.s32.totalorder %s81, %s82
    %p91 = scmp.eq.s32.totalorder %s15, 0
    %p92 = por %p90, %p91
    %p93 = scmp.ne.s32.totalorder %s81, %s82
    %p94 = scmp.eq.s32.totalorder %s16, 1
    %p95 = por %p93, %p94
    %p97 = scmp.ne.s32.totalorder %s82, %s96
    %p98 = scmp.eq.s32.totalorder %s16, 0
    %p99 = por %p97, %p98
    %s101 = sadd.s32 %s100, 1
    %p104 = scmp.eq.s32.totalorder %s10, 1
    %p105 = scmp.ne.s32.totalorder %s100, %s102
    %p106 = scmp.eq.s32.totalorder %s10, 0
    %p107 = por %p105, %p106
    %p108 = scmp.ne.s32.totalorder %s100, %s102
    %p109 = scmp.eq.s32.totalorder %s15, 1
    %p110 = por %p108, %p109
    %p111 = scmp.ne.s32.totalorder %s102, %s103
    %p112 = scmp.eq.s32.totalorder %s15, 0
    %p113 = por %p111, %p112
    %p114 = scmp.ne.s32.totalorder %s102, %s103
    %p115 = scmp.eq.s32.totalorder %s16, 1
    %p116 = por %p114, %p115
    %p118 = scmp.ne.s32.totalorder %s103, %s117
    %p119 = scmp.eq.s32.totalorder %s16, 0
    %p120 = por %p118, %p119
    %s121 = ssub.s32 %s17, %s29
    %s122 = ssub.s32 %s18, %s25
    %s123 = sor.u32 %s121, %s122
    %p124 = scmp.eq.s32.totalorder %s123, 0
    %s126 = sadd.s32 %s125, 1
    %s127 = scalar_select %p124, %s125, %s126
    %p130 = pneg %p124
    %p131 = scmp.eq.s32.totalorder %s10, 1
    %p132 = por %p130, %p131
    %p133 = scmp.ne.s32.totalorder %s125, %s128
    %p134 = scmp.eq.s32.totalorder %s10, 0
    %p135 = por %p133, %p134
    %p136 = scmp.ne.s32.totalorder %s125, %s128
    %p137 = scmp.eq.s32.totalorder %s15, 1
    %p138 = por %p136, %p137
    %p139 = scmp.ne.s32.totalorder %s128, %s129
    %p140 = scmp.eq.s32.totalorder %s15, 0
    %p141 = por %p139, %p140
    %p142 = scmp.ne.s32.totalorder %s128, %s129
    %p143 = scmp.eq.s32.totalorder %s16, 1
    %p144 = por %p142, %p143
    %p146 = scmp.ne.s32.totalorder %s129, %s145
    %p147 = scmp.eq.s32.totalorder %s16, 0
    %p148 = por %p146, %p147
    %p149 = scmp.le.s32.totalorder 1, %s10
    %p150 = scmp.lt.s32.totalorder %s10, 3
    %p151 = pnand %p149, %p150
    %p152 = pneg %p151
    // Predicated region
    $region9: #{deconv2d_bn_relu_fused.1} parent=5 // pred_check
      _
    $region10: #{deconv2d_bn_relu_fused.1} parent=5 // pred_check_branch
      %154 = sbr.rel (%p151) target = $region12
    $region11: #{deconv2d_bn_relu_fused.1} parent=5 // pred_region
      %s155 = ssub.s32 %s10, 1
      // Predicated region
      $region13: #{deconv2d_bn_relu_fused.1} parent=11 // pred_check
        %p156 = pneg %p71
      $region14: #{deconv2d_bn_relu_fused.1} parent=11 // pred_check_branch
        %158 = sbr.rel (%p156) target = $region16
      $region15: #{deconv2d_bn_relu_fused.1} parent=11 // pred_region
        _
      $region16: #{deconv2d_bn_relu_fused.1} parent=11 // pred_fallthru
        _
      // Predicated region
      $region17: #{deconv2d_bn_relu_fused.1} parent=11 // pred_check
        %p159 = pneg %p92
      $region18: #{deconv2d_bn_relu_fused.1} parent=11 // pred_check_branch
        %161 = sbr.rel (%p159) target = $region20
      $region19: #{deconv2d_bn_relu_fused.1} parent=11 // pred_region
        _
      $region20: #{deconv2d_bn_relu_fused.1} parent=11 // pred_fallthru
        _
      // Predicated region
      $region21: #{deconv2d_bn_relu_fused.1} parent=11 // pred_check
        %p162 = pneg %p113
      $region22: #{deconv2d_bn_relu_fused.1} parent=11 // pred_check_branch
        %164 = sbr.rel (%p162) target = $region24
      $region23: #{deconv2d_bn_relu_fused.1} parent=11 // pred_region
        _
      $region24: #{deconv2d_bn_relu_fused.1} parent=11 // pred_fallthru
        _
    $region12: #{deconv2d_bn_relu_fused.1} parent=5 // pred_fallthru
      _
    %p165 = scmp.lt.s32.totalorder %s10, 2
    // Predicated region
    $region25: #{deconv2d_bn_relu_fused.1} parent=5 // pred_check
      %p166 = pneg %p165
    $region26: #{deconv2d_bn_relu_fused.1} parent=5 // pred_check_branch
      %168 = sbr.rel (%p166) target = $region28
    $region27: #{deconv2d_bn_relu_fused.1} parent=5 // pred_region
      // Predicated region
      $region29: #{deconv2d_bn_relu_fused.1} parent=27 // pred_check
        %p169 = pneg %p44
      $region30: #{deconv2d_bn_relu_fused.1} parent=27 // pred_check_branch
        %171 = sbr.rel (%p169) target = $region32
      $region31: #{deconv2d_bn_relu_fused.1} parent=27 // pred_region
        %s172 = smul.u32 2, %s18
        %p173 = scmp.lt.s32.totalorder %s17, 1
        %s174 = scalar_select %p173, %s17, 1
        %p175 = scmp.lt.s32.totalorder %s172, 1
        %s176 = scalar_select %p175, %s172, 1
        %s177 = smul.addr %s174, 2
        %s178 = sadd.s32 %s176, %s177
        %s179 = smul.addr %s178, 4
        %s180 = scalar_lea.vmem %s0, %s179
        %s181 = smul.u32 2, %s18
      $region32: #{deconv2d_bn_relu_fused.1} parent=27 // pred_fallthru
        _
    $region28: #{deconv2d_bn_relu_fused.1} parent=5 // pred_fallthru
      _
    %p182 = scmp.le.s32.totalorder 1, %s10
    %p183 = scmp.lt.s32.totalorder %s10, 3
    %p184 = pnand %p182, %p183
    %p185 = pneg %p184
    // Predicated region
    $region33: #{deconv2d_bn_relu_fused.1} parent=5 // pred_check
      _
    $region34: #{deconv2d_bn_relu_fused.1} parent=5 // pred_check_branch
      %187 = sbr.rel (%p184) target = $region36
    $region35: #{deconv2d_bn_relu_fused.1} parent=5 // pred_region
      %s188 = ssub.s32 %s10, 1
      %s189 = smul.u32 2, %s20
      %p190 = scmp.lt.s32.totalorder %s19, 1
      %s191 = scalar_select %p190, %s19, 1
      %p192 = scmp.lt.s32.totalorder %s189, 1
      %s193 = scalar_select %p192, %s189, 1
      %s194 = smul.addr %s191, 2
      %s195 = sadd.s32 %s193, %s194
      %s196 = smul.addr %s195, 4
      %s197 = scalar_lea.vmem %s0, %s196
      %p198 = pneg %p50
      %p199 = pneg %p47
      %p200 = pneg %p71
      %p201 = pneg %p68
      %p202 = pneg %p92
      %p203 = pneg %p89
      %p204 = pneg %p113
      %p205 = pneg %p110
      %p206 = pneg %p141
      %p207 = pneg %p138
      %s208 = smul.u32 2, %s20
      %p209 = scmp.lt.s32.totalorder %s19, 1
      %s210 = scalar_select %p209, %s19, 1
      %p211 = scmp.lt.s32.totalorder %s208, 1
      %s212 = scalar_select %p211, %s208, 1
      %s213 = smul.addr %s210, 8
      %s214 = sadd.s32 %s212, %s213
      %s215 = smul.addr %s214, 4
      %s216 = scalar_lea.vmem %s4, %s215
      %s217 = smul.u32 2, %s20
      %p218 = scmp.lt.s32.totalorder %s19, 1
      %s219 = scalar_select %p218, %s19, 1
      %p220 = scmp.lt.s32.totalorder %s217, 1
      %s221 = scalar_select %p220, %s217, 1
      %s222 = smul.addr %s219, 2
      %s223 = sadd.s32 %s221, %s222
      %s224 = smul.addr %s223, 4
      %s225 = scalar_lea.vmem %s0, %s224
      %s226 = smul.u32 2, %s20
      %s227 = smul.u32 2, %s20
      %p228 = scmp.lt.s32.totalorder %s19, 1
      %s229 = scalar_select %p228, %s19, 1
      %p230 = scmp.lt.s32.totalorder %s227, 1
      %s231 = scalar_select %p230, %s227, 1
      %s232 = smul.addr %s229, 8
      %s233 = sadd.s32 %s231, %s232
      %s234 = smul.addr %s233, 4
      %s235 = scalar_lea.vmem %s4, %s234
      %s236 = smul.u32 2, %s20
      %v238 = vld [vmem:[%s225] sm:$0xff]
      %v240 = vcombine.high %v238, %v238
      %v242 = vpack.c.bf16 %v238, %v238
      %v243 = vpack.c.bf16 %v240, %v240
      %v244 = vld [vmem:[%s1] sm:$0xf]
      %v245 = vld [vmem:[%s1 + $0x4] sm:$0xf]
      %v246 = vld [vmem:[%s1 + $0x8] sm:$0xf]
      %v247 = vld [vmem:[%s1 + $0xc] sm:$0xf]
      %v252 = vunpack.c.l.b16 %v244
      %v253 = vunpack.c.l.b16 %v245
      %v254 = vunpack.c.l.b16 %v246
      %v255 = vunpack.c.l.b16 %v247
      %v256 = vpack.c.b16 %v253, %v252
      %v257 = vpack.c.b16 %v255, %v254
      %vm258 = vcmask 31744
      %v260 = vsel %vm258, %v256, 0
      %v263 = vsel %vm258, %v257, 0
      %vm265 = vcmask 1041408
      %v267 = vsel %vm265, %v242, 0
      %v270 = vsel %vm265, %v243, 0
      %272 = vmatprep.subr.bf16.mxu0 %v270
      %273 = vmatpush1.bf16.msra.mxu0 %v267
      %274 = vmatprep.subr.bf16.mxu0 0
      %275 = vmatpush1.bf16.msra.mxu0 0
      %276 = vmatprep.subr.bf16.mxu0 0
      %277 = vmatpush1.bf16.msra.mxu0 0
      %278 = vmatprep.subr.bf16.mxu0 0
      %279 = vmatpush1.bf16.msra.mxu0 0
      %280 = vmatprep.subr.bf16.mxu0 0
      %281 = vmatpush1.bf16.msra.mxu0 0
      %282 = vmatprep.subr.bf16.mxu0 0
      %283 = vmatpush1.bf16.msra.mxu0 0
      %284 = vmatprep.subr.bf16.mxu0 0
      %285 = vmatpush1.bf16.msra.mxu0 0
      %286 = vmatprep.subr.bf16.mxu0 0
      %287 = vmatpush1.bf16.msra.mxu0 0
      %288 = vmatprep.subr.bf16.mxu0 0
      %289 = vmatpush1.bf16.msra.mxu0 0
      %290 = vmatprep.subr.bf16.mxu0 0
      %291 = vmatpush1.bf16.msra.mxu0 0
      %292 = vmatprep.subr.bf16.mxu0 0
      %293 = vmatpush1.bf16.msra.mxu0 0
      %294 = vmatprep.subr.bf16.mxu0 0
      %295 = vmatpush1.bf16.msra.mxu0 0
      %296 = vmatprep.subr.bf16.mxu0 0
      %297 = vmatpush1.bf16.msra.mxu0 0
      %298 = vmatprep.subr.bf16.mxu0 0
      %299 = vmatpush1.bf16.msra.mxu0 0
      %300 = vmatprep.subr.bf16.mxu0 0
      %301 = vmatpush1.bf16.msra.mxu0 0
      %302 = vmatprep.subr.bf16.mxu0 0
      %303 = vmatpush1.bf16.msra.mxu0 0
      %304 = vmatprep.mubr.bf16.mxu0 0
      %305 = vmatmul.mubr.bf16.gmra.mrb[0].mxu0 %v260
      %v306 = vpop.f32.mrb[0].mxu0
      %v307 = vadd.f32 0.0, %v306
      %v308 = vpop.f32.mrb[0].mxu0
      %v309 = vadd.f32 0.0, %v308
      %v310 = vpop.f32.mrb[0].mxu0
      %v311 = vadd.f32 0.0, %v310
      %v312 = vpop.f32.mrb[0].mxu0
      %v313 = vadd.f32 0.0, %v312
      %314 = vmatprep.mubr.bf16.mxu0 0
      %315 = vmatmul.mubr.bf16.gmra.mrb[0].mxu0 %v263
      %v316 = vpop.f32.mrb[0].mxu0
      %v317 = vadd.f32 0.0, %v316
      %v318 = vpop.f32.mrb[0].mxu0
      %v319 = vadd.f32 0.0, %v318
      %v320 = vpop.f32.mrb[0].mxu0
      %v321 = vadd.f32 0.0, %v320
      %v322 = vpop.f32.mrb[0].mxu0
      %v323 = vadd.f32 0.0, %v322
      %324 = vdwg.mxu0
      %v325 = vld [vmem:[%s2] sm:$0xff]
      %v326 = vld [vmem:[%s2 + $0x8] sm:$0xff]
      %v327 = vld [vmem:[%s2 + $0x10] sm:$0xff]
      %v328 = vld [vmem:[%s2 + $0x18] sm:$0xff]
      %330 = vset.pattern.permute.xlu0 0
      %331 = vperm.xlu0 %330, %v325
      %v332 = vpop.permute.xlu0 %331
      %335 = vset.pattern.permute.xlu0 0
      %336 = vperm.xlu0 %335, %v326
      %v337 = vpop.permute.xlu0 %336
      %340 = vset.pattern.permute.xlu0 0
      %341 = vperm.xlu0 %340, %v327
      %v342 = vpop.permute.xlu0 %341
      %345 = vset.pattern.permute.xlu0 0
      %346 = vperm.xlu0 %345, %v328
      %v347 = vpop.permute.xlu0 %346
      %v349 = vmul.f32 %v307, %v332
      %v350 = vmul.f32 %v309, %v332
      %v351 = vmul.f32 %v311, %v337
      %v352 = vmul.f32 %v313, %v337
      %v353 = vmul.f32 %v317, %v342
      %v354 = vmul.f32 %v319, %v342
      %v355 = vmul.f32 %v321, %v347
      %v356 = vmul.f32 %v323, %v347
      %v357 = vld [vmem:[%s3] sm:$0xff]
      %v358 = vld [vmem:[%s3 + $0x8] sm:$0xff]
      %v359 = vld [vmem:[%s3 + $0x10] sm:$0xff]
      %v360 = vld [vmem:[%s3 + $0x18] sm:$0xff]
      %362 = vset.pattern.permute.xlu0 0
      %363 = vperm.xlu0 %362, %v357
      %v364 = vpop.permute.xlu0 %363
      %367 = vset.pattern.permute.xlu0 0
      %368 = vperm.xlu0 %367, %v358
      %v369 = vpop.permute.xlu0 %368
      %372 = vset.pattern.permute.xlu0 0
      %373 = vperm.xlu0 %372, %v359
      %v374 = vpop.permute.xlu0 %373
      %377 = vset.pattern.permute.xlu0 0
      %378 = vperm.xlu0 %377, %v360
      %v379 = vpop.permute.xlu0 %378
      %v381 = vadd.f32 %v349, %v364
      %v382 = vadd.f32 %v350, %v364
      %v383 = vadd.f32 %v351, %v369
      %v384 = vadd.f32 %v352, %v369
      %v385 = vadd.f32 %v353, %v374
      %v386 = vadd.f32 %v354, %v374
      %v387 = vadd.f32 %v355, %v379
      %v388 = vadd.f32 %v356, %v379
      %v389 = vmax.f32 %v381, 0.0
      %v390 = vmax.f32 %v382, 0.0
      %v391 = vmax.f32 %v383, 0.0
      %v392 = vmax.f32 %v384, 0.0
      %v393 = vmax.f32 %v385, 0.0
      %v394 = vmax.f32 %v386, 0.0
      %v395 = vmax.f32 %v387, 0.0
      %v396 = vmax.f32 %v388, 0.0
      %v397 = vpack.c.bf16 %v391, %v389
      %v398 = vpack.c.bf16 %v392, %v390
      %v399 = vpack.c.bf16 %v395, %v393
      %v400 = vpack.c.bf16 %v396, %v394
      %v405 = vunpack.c.l.b16 %v397
      %v406 = vunpack.c.l.b16 %v398
      %v407 = vunpack.c.h.b16 %v397
      %v408 = vunpack.c.h.b16 %v398
      %v409 = vunpack.c.l.b16 %v399
      %v410 = vunpack.c.l.b16 %v400
      %v411 = vunpack.c.h.b16 %v399
      %v412 = vunpack.c.h.b16 %v400
      %v413 = vpack.c.b16 %v406, %v405
      %v414 = vpack.c.b16 %v408, %v407
      %v415 = vpack.c.b16 %v410, %v409
      %v416 = vpack.c.b16 %v412, %v411
      %421 = vst [vmem:[%s235] sm:$0xff] %v413
      %422 = vst [vmem:[%s235 + $0x8] sm:$0xff] %v414
      %423 = vst [vmem:[%s235 + $0x10] sm:$0xff] %v415
      %424 = vst [vmem:[%s235 + $0x18] sm:$0xff] %v416
      %s425 = smul.u32 2, %s20
      %p426 = scmp.lt.s32.totalorder %s19, 1
      %s427 = scalar_select %p426, %s19, 1
      %p428 = scmp.lt.s32.totalorder %s425, 1
      %s429 = scalar_select %p428, %s425, 1
      %s430 = smul.addr %s427, 8
      %s431 = sadd.s32 %s429, %s430
      %s432 = smul.addr %s431, 4
      %s433 = scalar_lea.vmem %s4, %s432
      // Predicated region
      $region37: #{deconv2d_bn_relu_fused.1} parent=35 // pred_check
        %p434 = pneg %p138
      $region38: #{deconv2d_bn_relu_fused.1} parent=35 // pred_check_branch
        %436 = sbr.rel (%p434) target = $region40
      $region39: #{deconv2d_bn_relu_fused.1} parent=35 // pred_region
        %s437 = smul.u32 2, %s20
      $region40: #{deconv2d_bn_relu_fused.1} parent=35 // pred_fallthru
        _
    $region36: #{deconv2d_bn_relu_fused.1} parent=5 // pred_fallthru
      _
    %p438 = scmp.le.s32.totalorder 2, %s10
    // Predicated region
    $region41: #{deconv2d_bn_relu_fused.1} parent=5 // pred_check
      %p439 = pneg %p438
    $region42: #{deconv2d_bn_relu_fused.1} parent=5 // pred_check_branch
      %441 = sbr.rel (%p439) target = $region44
    $region43: #{deconv2d_bn_relu_fused.1} parent=5 // pred_region
      %s442 = ssub.s32 %s10, 2
      // Predicated region
      $region45: #{deconv2d_bn_relu_fused.1} parent=43 // pred_check
        %p443 = pneg %p144
      $region46: #{deconv2d_bn_relu_fused.1} parent=43 // pred_check_branch
        %445 = sbr.rel (%p443) target = $region48
      $region47: #{deconv2d_bn_relu_fused.1} parent=43 // pred_region
        %s446 = smul.u32 2, %s22
        %p447 = scmp.lt.s32.totalorder %s21, 1
        %s448 = scalar_select %p447, %s21, 1
        %p449 = scmp.lt.s32.totalorder %s446, 1
        %s450 = scalar_select %p449, %s446, 1
        %s451 = smul.addr %s448, 8
        %s452 = sadd.s32 %s450, %s451
        %s453 = smul.addr %s452, 4
        %s454 = scalar_lea.vmem %s4, %s453
      $region48: #{deconv2d_bn_relu_fused.1} parent=43 // pred_fallthru
        _
    $region44: #{deconv2d_bn_relu_fused.1} parent=5 // pred_fallthru
      _
  $region6: #{deconv2d_bn_relu_fused.1} parent=0 // loop_footer
    %s14 = sadd.s32 1, %s10
  $region7: #{deconv2d_bn_relu_fused.1} parent=0 // loop_footer_branch
    %9 = sbr.rel target = $region3
  $region8: #{deconv2d_bn_relu_fused.1} parent=0 // loop_exit
    _

</llo_original>
